<compile_context>
chip_gen: v5e
topology: v5e:2x2
jax: 0.10.0
libtpu: 0.0.40
codegen_flags: <defaults>
</compile_context>

<pallas_src>
import jax
import jax.numpy as jnp
from jax.experimental import pallas as pl
from jax.experimental.pallas import tpu as pltpu


def _round_up(x, m):
    return (x + m - 1) // m * m


# ---------------------------------------------------------------------------
# One-time hardware / capability queries (import time, never per call).
# ---------------------------------------------------------------------------
def _query_vmem_capacity():
    try:
        return int(pltpu.get_tpu_info().vmem_capacity_bytes)
    except Exception:
        return 64 * 1024 * 1024  # conservative (v7x-sized) fallback


_VMEM_CAPACITY = _query_vmem_capacity()
# Leave headroom for compiler-internal scratch.
_VMEM_CEILING = int(_VMEM_CAPACITY * 0.82)


def _probe_kernel(x_ref, o_ref):
    o_ref[...] = x_ref[...] + 1.0


def _probe_pipeline_mode():
    """One-time check that this jax build accepts BlockSpec(pipeline_mode=...)."""
    try:
        fn = pl.pallas_call(
            _probe_kernel,
            out_shape=jax.ShapeDtypeStruct((8, 128), jnp.float32),
            grid=(1,),
            in_specs=[pl.BlockSpec((8, 128), lambda i: (0, 0),
                                   pipeline_mode=pl.Buffered(1))],
            out_specs=pl.BlockSpec((8, 128), lambda i: (0, 0)),
        )
        jax.block_until_ready(fn(jnp.zeros((8, 128), jnp.float32)))
        return True
    except Exception:
        return False


_PIPELINE_MODE_OK = _probe_pipeline_mode()


def _bspec(shape, index_map, buffer_count=None):
    if buffer_count is None or not _PIPELINE_MODE_OK:
        return pl.BlockSpec(shape, index_map)
    return pl.BlockSpec(shape, index_map, pipeline_mode=pl.Buffered(buffer_count))


# ---------------------------------------------------------------------------
# Kernels
# ---------------------------------------------------------------------------
def _ffn_kernel_resident(x_ref, w1_ref, b1_ref, w2_ref, b2_ref, o_ref):
    """Fast path (whole hidden dim resident): no accumulator scratch."""
    h = jnp.dot(x_ref[...], w1_ref[...], preferred_element_type=jnp.float32)
    h = jnp.maximum(h + b1_ref[...].astype(jnp.float32), 0.0)
    # Dropout = identity (eval mode).
    y = jnp.dot(h.astype(w2_ref.dtype), w2_ref[...],
                preferred_element_type=jnp.float32)
    y = jnp.maximum(y + b2_ref[...].astype(jnp.float32), 0.0)
    o_ref[...] = y.astype(o_ref.dtype)


def _ffn_kernel_acc(x_ref, w1_ref, b1_ref, w2_ref, b2_ref, o_ref, acc_ref):
    """Streaming path (hidden dim tiled): f32 accumulation over k."""
    k = pl.program_id(1)

    @pl.when(k == 0)
    def _init():
        acc_ref[...] = jnp.zeros_like(acc_ref)

    h = jnp.dot(x_ref[...], w1_ref[...], preferred_element_type=jnp.float32)
    h = jnp.maximum(h + b1_ref[...].astype(jnp.float32), 0.0)
    acc_ref[...] += jnp.dot(h.astype(w2_ref.dtype), w2_ref[...],
                            preferred_element_type=jnp.float32)

    @pl.when(k == pl.num_programs(1) - 1)
    def _finalize():
        y = acc_ref[...] + b2_ref[...].astype(jnp.float32)
        o_ref[...] = jnp.maximum(y, 0.0).astype(o_ref.dtype)   # ReLU; dropout=id


# ---------------------------------------------------------------------------
# Tile selection & call construction (all static-shape Python; jit friendly)
# ---------------------------------------------------------------------------
def _vmem_need(tm, hid_tile, f_in, f_out, itemsize, streaming, w_bufs):
    need = 2 * itemsize * tm * (f_in + f_out)                       # x / out tiles
    need += w_bufs * itemsize * (f_in * hid_tile + hid_tile * f_out + hid_tile)
    need += itemsize * f_out                                        # b2
    need += 4 * tm * hid_tile                                       # live f32 h
    if streaming:
        need += 4 * tm * f_out                                      # f32 accumulator
    return need


def _choose_tiles(n, f_in, f_hid, f_out, itemsize, row_tile, hid_tile):
    # Row tile: large, multiple of 16 (covers f32 sublane=8 and bf16 packing).
    tm = min(_round_up(max(row_tile, 16), 16), _round_up(n, 16))
    # Guarantee >= 2 row blocks when N >= 512 so both v7x TCs get work.
    if n >= 512:
        tm = min(tm, _round_up(pl.cdiv(n, 2), 256))

    if hid_tile is not None:                       # user override
        if hid_tile != f_hid:
            assert f_hid % hid_tile == 0 and hid_tile % 128 == 0, (
                "hid_tile must be a multiple of 128 dividing hidden_size")
        return tm, hid_tile

    resident_bufs = 1 if _PIPELINE_MODE_OK else 2
    # Prefer whole-hidden residency: weights fetched from HBM exactly once.
    if _vmem_need(tm, f_hid, f_in, f_out, itemsize, False,
                  resident_bufs) <= _VMEM_CEILING:
        return tm, f_hid

    # Otherwise tile the hidden dim: largest fitting divisor of f_hid,
    # preferring multiples of 256 (v6e/v7x MXU), then 128.
    if f_hid % 128 == 0:
        candidates = [d for d in range(f_hid, 127, -128) if f_hid % d == 0]
        candidates.sort(key=lambda d: (d % 256 != 0, -d))
        cur_tm = tm
        while cur_tm >= 16:
            for cand in candidates:
                if _vmem_need(cur_tm, cand, f_in, f_out, itemsize, True,
                              2) <= _VMEM_CEILING:
                    return cur_tm, cand
            if cur_tm == 16:
                break
            cur_tm = max(16, cur_tm // 2)
    # Last resort: whole hidden dim resident.
    return tm, f_hid


def _build_call(n, f_in, f_hid, f_out, tm, hid_tile, compute_dtype, out_dtype):
    itemsize = jnp.dtype(compute_dtype).itemsize
    num_k = f_hid // hid_tile
    num_row_blocks = pl.cdiv(n, tm)

    flops = 2 * n * (f_in * f_hid + f_hid * f_out)
    weight_bytes = itemsize * (f_in * f_hid + f_hid * f_out + f_hid + f_out)
    weight_fetches = num_row_blocks if num_k > 1 else 1
    bytes_accessed = int(itemsize * n * (f_in + f_out)
                         + weight_fetches * weight_bytes)

    if num_k == 1:
        # Resident fast path: constant-index weights, single buffered.
        w_bufs = 1 if _PIPELINE_MODE_OK else 2
        grid = (num_row_blocks,)
        in_specs = [
            pl.BlockSpec((tm, f_in), lambda i: (i, 0)),
            _bspec((f_in, f_hid), lambda i: (0, 0), 1),
            _bspec((1, f_hid), lambda i: (0, 0), 1),
            _bspec((f_hid, f_out), lambda i: (0, 0), 1),
            _bspec((1, f_out), lambda i: (0, 0), 1),
        ]
        out_specs = pl.BlockSpec((tm, f_out), lambda i: (i, 0))
        kernel = _ffn_kernel_resident
        scratch = []
        dim_sem = ("parallel",)
        streaming = False
    else:
        # Streaming path: deeper buffering on the weight stream when VMEM is
        # plentiful (v5e/v6e: 128 MiB), plain double-buffering otherwise (v7x).
        w_bufs = 2
        if _PIPELINE_MODE_OK and _VMEM_CAPACITY >= 96 * 1024 * 1024:
            if _vmem_need(tm, hid_tile, f_in, f_out, itemsize, True,
                          3) <= _VMEM_CEILING:
                w_bufs = 3
        w_req = w_bufs if w_bufs != 2 else None
        grid = (num_row_blocks, num_k)
        in_specs = [
            pl.BlockSpec((tm, f_in), lambda i, k: (i, 0)),
            _bspec((f_in, hid_tile), lambda i, k: (0, k), w_req),
            pl.BlockSpec((1, hid_tile), lambda i, k: (0, k)),
            _bspec((hid_tile, f_out), lambda i, k: (k, 0), w_req),
            _bspec((1, f_out), lambda i, k: (0, 0), 1),   # constant -> 1 buffer
        ]
        out_specs = pl.BlockSpec((tm, f_out), lambda i, k: (i, 0))
        kernel = _ffn_kernel_acc
        scratch = [pltpu.VMEM((tm, f_out), jnp.float32)]
        dim_sem = ("parallel", "arbitrary")
        streaming = True

    need = _vmem_need(tm, hid_tile, f_in, f_out, itemsize, streaming, w_bufs)
    vmem_limit = int(min(max(int(need * 1.5), 32 * 1024 * 1024), _VMEM_CEILING))
    vmem_limit = max(vmem_limit, int(need * 1.1))

    return pl.pallas_call(
        kernel,
        out_shape=jax.ShapeDtypeStruct((n, f_out), out_dtype),
        grid_spec=pltpu.PrefetchScalarGridSpec(
            num_scalar_prefetch=0,
            grid=grid,
            in_specs=in_specs,
            out_specs=out_specs,
            scratch_shapes=scratch,
        ),
        compiler_params=pltpu.CompilerParams(
            dimension_semantics=dim_sem,
            vmem_limit_bytes=vmem_limit,
        ),
        cost_estimate=pl.CostEstimate(
            flops=int(flops), transcendentals=0, bytes_accessed=bytes_accessed),
    )


def feed_forward_block(x, w1, b1, w2, b2, *, row_tile=512, hid_tile=None,
                       compute_dtype=None):
    """x: [..., F_in] -> [..., F_out]; fused Linear-ReLU-(Drop)-Linear-ReLU-(Drop).

    compute_dtype: optionally run the MXU in bf16 (f32 accumulation); output
    keeps x.dtype.
    """
    orig_shape = x.shape
    f_in = orig_shape[-1]
    f_hid = w1.shape[1]
    f_out = w2.shape[1]
    out_dtype = x.dtype

    cdtype = jnp.dtype(compute_dtype) if compute_dtype is not None else jnp.dtype(x.dtype)
    x2d = x.reshape(-1, f_in).astype(cdtype)
    w1c = w1.astype(cdtype)
    w2c = w2.astype(cdtype)
    b1_2d = b1.reshape(1, f_hid)        # biases stay in their own dtype (added in f32)
    b2_2d = b2.reshape(1, f_out)
    n = x2d.shape[0]

    tm, hid_tile = _choose_tiles(n, f_in, f_hid, f_out, cdtype.itemsize,
                                 row_tile, hid_tile)
    call = _build_call(n, f_in, f_hid, f_out, tm, hid_tile, cdtype, out_dtype)
    out = call(x2d, w1c, b1_2d, w2c, b2_2d)
    return out.reshape(*orig_shape[:-1], f_out)


def init_params(key, in_features, hidden_size, out_features, dtype=jnp.float32):
    """Deterministic init mimicking nn.Linear's U(-1/sqrt(fan_in), 1/sqrt(fan_in))."""
    k1, k2, k3, k4 = jax.random.split(key, 4)
    lim1 = 1.0 / (in_features ** 0.5)
    lim2 = 1.0 / (hidden_size ** 0.5)
    w1 = jax.random.uniform(k1, (in_features, hidden_size), dtype, -lim1, lim1)
    b1 = jax.random.uniform(k2, (hidden_size,), dtype, -lim1, lim1)
    w2 = jax.random.uniform(k3, (hidden_size, out_features), dtype, -lim2, lim2)
    b2 = jax.random.uniform(k4, (out_features,), dtype, -lim2, lim2)
    return w1, b1, w2, b2


if __name__ == "__main__":
    # Shapes consistent with the module's forward: x = [batch, seq, in_features]
    batch, seq = 2, 8
    in_features, hidden_size, out_features = 32, 128, 32

    key = jax.random.PRNGKey(0)
    kx, kp = jax.random.split(key)
    x = jax.random.normal(kx, (batch, seq, in_features), dtype=jnp.float32)
    w1, b1, w2, b2 = init_params(kp, in_features, hidden_size, out_features)

    # Pure-JAX reference (eval-mode dropout = identity).
    ref = jnp.maximum(jnp.maximum(x @ w1 + b1, 0.0) @ w2 + b2, 0.0)

    # Resident fast path (num_k == 1, no accumulator scratch).
    out = jax.block_until_ready(feed_forward_block(x, w1, b1, w2, b2))
    assert out.shape == (batch, seq, out_features)
    assert jnp.allclose(out, ref, atol=1e-5, rtol=1e-5)

    # Streaming path: ragged row blocks (N % tm != 0) + hidden-dim tiling
    # (num_k > 1, f32 accumulator, pl.when init/finalize).
    in2, hid2, out2 = 64, 256, 48
    x2 = jax.random.normal(jax.random.PRNGKey(3), (3, 25, in2), dtype=jnp.float32)
    w1b, b1b, w2b, b2b = init_params(jax.random.PRNGKey(4), in2, hid2, out2)
    ref2 = jnp.maximum(jnp.maximum(x2 @ w1b + b1b, 0.0) @ w2b + b2b, 0.0)
    out2_ = jax.block_until_ready(
        feed_forward_block(x2, w1b, b1b, w2b, b2b, row_tile=64, hid_tile=128))
    assert out2_.shape == (3, 25, out2)
    assert jnp.allclose(out2_, ref2, atol=1e-4, rtol=1e-4)

    # bf16 MXU compute path (f32 accumulation); looser tolerance.
    out_bf16 = jax.block_until_ready(
        feed_forward_block(x, w1, b1, w2, b2, compute_dtype=jnp.bfloat16))
    assert out_bf16.shape == (batch, seq, out_features)
    assert jnp.allclose(out_bf16, ref, atol=0.15, rtol=0.05)

    print("KERNEL_OK")
</pallas_src>

<mosaic_0001>
module attributes {stable_mosaic.version = 11 : i64} {
  func.func @_probe_kernel(%arg0: i32, %arg1: memref<8x128xf32, #tpu.memory_space<vmem>>, %arg2: memref<8x128xf32, #tpu.memory_space<vmem>>) attributes {dimension_semantics = [#tpu.dimension_semantics<arbitrary>], iteration_bounds = array<i64: 1>, scalar_prefetch = 0 : i64, scratch_operands = 0 : i64, tpu.core_type = #tpu.core_type<tc>, window_params = [{pipeline_mode = #tpu.pipeline_mode<synchronous>, transform_indices = @transform_0, window_bounds = array<i64: 8, 128>}, {pipeline_mode = #tpu.pipeline_mode<synchronous>, transform_indices = @transform_1, window_bounds = array<i64: 8, 128>}]} {
    %c0 = arith.constant 0 : index
    %c0_0 = arith.constant 0 : index
    %0 = vector.load %arg1[%c0, %c0_0] : memref<8x128xf32, #tpu.memory_space<vmem>>, vector<8x128xf32>
    %cst = arith.constant 1.000000e+00 : f32
    %1 = vector.broadcast %cst : f32 to vector<8x128xf32>
    %2 = arith.addf %0, %1 : vector<8x128xf32>
    %c0_1 = arith.constant 0 : index
    %c0_2 = arith.constant 0 : index
    %3 = vector.load %arg2[%c0_1, %c0_2] : memref<8x128xf32, #tpu.memory_space<vmem>>, vector<8x128xf32>
    tpu.vector_store %arg2[%c0_1, %c0_2], %2 {strides = array<i32>} : memref<8x128xf32, #tpu.memory_space<vmem>>, vector<8x128xf32>,
    return
  }
  func.func @transform_0(%arg0: i32) -> (i32, i32) {
    %c0_i32 = arith.constant 0 : i32
    %c0_i32_0 = arith.constant 0 : i32
    %c0_i32_1 = arith.constant 0 : i32
    return %c0_i32, %c0_i32_0 : i32, i32
  }
  func.func @transform_1(%arg0: i32) -> (i32, i32) {
    %c0_i32 = arith.constant 0 : i32
    %c0_i32_0 = arith.constant 0 : i32
    %c0_i32_1 = arith.constant 0 : i32
    return %c0_i32, %c0_i32_0 : i32, i32
  }
}

module attributes {stable_mosaic.version = 11 : i64} {
  func.func @_ffn_kernel_resident(%arg0: i32, %arg1: memref<16x32xf32, #tpu.memory_space<vmem>>, %arg2: memref<32x128xf32, #tpu.memory_space<vmem>>, %arg3: memref<1x128xf32, #tpu.memory_space<vmem>>, %arg4: memref<128x32xf32, #tpu.memory_space<vmem>>, %arg5: memref<1x32xf32, #tpu.memory_space<vmem>>, %arg6: memref<16x32xf32, #tpu.memory_space<vmem>>) attributes {dimension_semantics = [#tpu.dimension_semantics<parallel>], iteration_bounds = array<i64: 1>, scalar_prefetch = 0 : i64, scratch_operands = 0 : i64, tpu.core_type = #tpu.core_type<tc>, window_params = [{transform_indices = @transform_0, window_bounds = array<i64: 16, 32>}, {pipeline_mode = #tpu.pipeline_mode<synchronous>, transform_indices = @transform_1, window_bounds = array<i64: 32, 128>}, {pipeline_mode = #tpu.pipeline_mode<synchronous>, transform_indices = @transform_2, window_bounds = array<i64: 1, 128>}, {pipeline_mode = #tpu.pipeline_mode<synchronous>, transform_indices = @transform_3, window_bounds = array<i64: 128, 32>}, {pipeline_mode = #tpu.pipeline_mode<synchronous>, transform_indices = @transform_4, window_bounds = array<i64: 1, 32>}, {transform_indices = @transform_5, window_bounds = array<i64: 16, 32>}]} {
    %c0 = arith.constant 0 : index
    %c0_0 = arith.constant 0 : index
    %0 = vector.load %arg1[%c0, %c0_0] : memref<16x32xf32, #tpu.memory_space<vmem>>, vector<16x32xf32>
    %c0_1 = arith.constant 0 : index
    %c0_2 = arith.constant 0 : index
    %1 = vector.load %arg2[%c0_1, %c0_2] : memref<32x128xf32, #tpu.memory_space<vmem>>, vector<32x128xf32>
    %cst = arith.constant dense<0.000000e+00> : vector<16x128xf32>
    %2 = tpu.matmul %0, %1, %cst {dimension_numbers = #tpu.dot_dimension_numbers<[1], [0], [0], [1], [0, 0, 1, 1], [], []>} : vector<16x32xf32>, vector<32x128xf32>, vector<16x128xf32> -> vector<16x128xf32>
    %c0_3 = arith.constant 0 : index
    %c0_4 = arith.constant 0 : index
    %3 = vector.load %arg3[%c0_3, %c0_4] : memref<1x128xf32, #tpu.memory_space<vmem>>, vector<1x128xf32>
    %4 = vector.broadcast %3 : vector<1x128xf32> to vector<16x128xf32>
    %5 = arith.addf %2, %4 : vector<16x128xf32>
    %cst_5 = arith.constant 0.000000e+00 : f32
    %6 = vector.broadcast %cst_5 : f32 to vector<16x128xf32>
    %7 = arith.maximumf %5, %6 : vector<16x128xf32>
    %c0_6 = arith.constant 0 : index
    %c0_7 = arith.constant 0 : index
    %8 = vector.load %arg4[%c0_6, %c0_7] : memref<128x32xf32, #tpu.memory_space<vmem>>, vector<128x32xf32>
    %cst_8 = arith.constant dense<0.000000e+00> : vector<16x32xf32>
    %9 = tpu.matmul %7, %8, %cst_8 {dimension_numbers = #tpu.dot_dimension_numbers<[1], [0], [0], [1], [0, 0, 1, 1], [], []>} : vector<16x128xf32>, vector<128x32xf32>, vector<16x32xf32> -> vector<16x32xf32>
    %c0_9 = arith.constant 0 : index
    %c0_10 = arith.constant 0 : index
    %10 = vector.load %arg5[%c0_9, %c0_10] : memref<1x32xf32, #tpu.memory_space<vmem>>, vector<1x32xf32>
    %11 = vector.broadcast %10 : vector<1x32xf32> to vector<16x32xf32>
    %12 = arith.addf %9, %11 : vector<16x32xf32>
    %cst_11 = arith.constant 0.000000e+00 : f32
    %13 = vector.broadcast %cst_11 : f32 to vector<16x32xf32>
    %14 = arith.maximumf %12, %13 : vector<16x32xf32>
    %c0_12 = arith.constant 0 : index
    %c0_13 = arith.constant 0 : index
    %15 = vector.load %arg6[%c0_12, %c0_13] : memref<16x32xf32, #tpu.memory_space<vmem>>, vector<16x32xf32>
    tpu.vector_store %arg6[%c0_12, %c0_13], %14 {strides = array<i32>} : memref<16x32xf32, #tpu.memory_space<vmem>>, vector<16x32xf32>,
    return
  }
  func.func @transform_0(%arg0: i32) -> (i32, i32) {
    %c0_i32 = arith.constant 0 : i32
    %c0_i32_0 = arith.constant 0 : i32
    return %arg0, %c0_i32 : i32, i32
  }
  func.func @transform_1(%arg0: i32) -> (i32, i32) {
    %c0_i32 = arith.constant 0 : i32
    %c0_i32_0 = arith.constant 0 : i32
    %c0_i32_1 = arith.constant 0 : i32
    return %c0_i32, %c0_i32_0 : i32, i32
  }
  func.func @transform_2(%arg0: i32) -> (i32, i32) {
    %c0_i32 = arith.constant 0 : i32
    %c0_i32_0 = arith.constant 0 : i32
    %c0_i32_1 = arith.constant 0 : i32
    return %c0_i32, %c0_i32_0 : i32, i32
  }
  func.func @transform_3(%arg0: i32) -> (i32, i32) {
    %c0_i32 = arith.constant 0 : i32
    %c0_i32_0 = arith.constant 0 : i32
    %c0_i32_1 = arith.constant 0 : i32
    return %c0_i32, %c0_i32_0 : i32, i32
  }
  func.func @transform_4(%arg0: i32) -> (i32, i32) {
    %c0_i32 = arith.constant 0 : i32
    %c0_i32_0 = arith.constant 0 : i32
    %c0_i32_1 = arith.constant 0 : i32
    return %c0_i32, %c0_i32_0 : i32, i32
  }
  func.func @transform_5(%arg0: i32) -> (i32, i32) {
    %c0_i32 = arith.constant 0 : i32
    %c0_i32_0 = arith.constant 0 : i32
    return %arg0, %c0_i32 : i32, i32
  }
}

</mosaic_0001>

<llo_original>
// kernel: tpu_custom_call.1
$region0: #{tpu_custom_call.1}
  #allocation0 [shape = 'u32[]', space=smem, size = 0x4, offset = 0x4, fixed_abs, tag = 'smem constant byte address 0x4 - core index']
  #allocation1 [shape = 'u32[72,128]{1,0:T(1,128)}', space=vmem, size = 0x9000, scoped, tag = 'internal scratch']
  %s0 = inlined_call_operand.hbm [shape: f32[8,128], index: 0, kind: input, shape index: {}]
  %s1 = inlined_call_operand.hbm [shape: f32[8,128], index: 1, kind: output, shape index: {}]
  %s2 = sld [smem:[#allocation0]]
  $region18: #{tpu_custom_call.1} parent=0
    _
  %s4 = ssub.s32 1, %s2
  %s5 = scalar_select 0, %s4, %s2
  $region1: #{tpu_custom_call.1} parent=0
    #allocation2 [shape = 'u8[4096]{0}', space=vmem, size = 0x1000, scoped, tag = 'input window, operand 0, single buffered']
    #allocation3 [shape = 's32[1]{0}', space=sflag, size = 0x4, scoped, tag = 'scoped memory for tpu_custom_call.1']
    #allocation4 [shape = 's32[1]{0}', space=sflag, size = 0x4, scoped, tag = 'scoped memory for tpu_custom_call.1']
    #allocation5 [shape = 'u8[4096]{0}', space=vmem, size = 0x1000, scoped, tag = 'output window, operand 0, single buffered']
    %6 = vsyncpa [#allocation3], 0
    %7 = vsyncpa [#allocation4], 0
    // Predicated region
    $region2: #{tpu_custom_call.1} parent=1 // pred_check
      _
    $region3: #{tpu_custom_call.1} parent=1 // pred_check_branch
      %9 = sbr.rel (0) target = $region5
    $region4: #{tpu_custom_call.1} parent=1 // pred_region
      %11 = vsyncadd [#allocation3], 0
      %s13 = sshll.u32 %s0, 4
      %s14 = int_to_ptr.hbm [resolvable:$true] %s13
      %s15 = sshll.u32 [#allocation2], 4
      %s16 = int_to_ptr.vmem [resolvable:$true] %s15
      %18 = dma.hbm_to_vmem [thread:$0]  %s14, 128, %s16, [#allocation3]
    $region5: #{tpu_custom_call.1} parent=1 // pred_fallthru
      _
    // Predicated region
    $region6: #{tpu_custom_call.1} parent=1 // pred_check
      _
    $region7: #{tpu_custom_call.1} parent=1 // pred_check_branch
      %20 = sbr.rel (0) target = $region9
    $region8: #{tpu_custom_call.1} parent=1 // pred_region
      %22 = dma.done [#allocation3], 128
    $region9: #{tpu_custom_call.1} parent=1 // pred_fallthru
      _
    %v23 = vld [vmem:[#allocation2] sm:$0xff]
    %v24 = vadd.f32 %v23, 1.0
    %25 = vst [vmem:[#allocation5] sm:$0xff] %v24
    // Predicated region
    $region10: #{tpu_custom_call.1} parent=1 // pred_check
      _
    $region11: #{tpu_custom_call.1} parent=1 // pred_check_branch
      %27 = sbr.rel (0) target = $region13
    $region12: #{tpu_custom_call.1} parent=1 // pred_region
      %29 = vsyncadd [#allocation4], 0
      %s31 = sshll.u32 [#allocation5], 4
      %s32 = int_to_ptr.vmem [resolvable:$true] %s31
      %s33 = sshll.u32 %s1, 4
      %s34 = int_to_ptr.hbm [resolvable:$true] %s33
      %36 = dma.vmem_to_hbm [thread:$0]  %s32, 128, %s34, [#allocation4]
    $region13: #{tpu_custom_call.1} parent=1 // pred_fallthru
      _
    // Predicated region
    $region14: #{tpu_custom_call.1} parent=1 // pred_check
      _
    $region15: #{tpu_custom_call.1} parent=1 // pred_check_branch
      %38 = sbr.rel (0) target = $region17
    $region16: #{tpu_custom_call.1} parent=1 // pred_region
      %40 = dma.done [#allocation4], 128
    $region17: #{tpu_custom_call.1} parent=1 // pred_fallthru
      _
    %41 = vsyncpa [#allocation3], 1
    %42 = vsyncpa [#allocation4], 1

// kernel: tpu_custom_call.1
$region0: #{tpu_custom_call.1}
  #allocation0 [shape = 'u32[]', space=smem, size = 0x4, offset = 0x4, fixed_abs, tag = 'smem constant byte address 0x4 - core index']
  #allocation1 [shape = 'u32[72,128]{1,0:T(1,128)}', space=vmem, size = 0x9000, scoped, tag = 'internal scratch']
  %s0 = inlined_call_operand.vmem [shape: f32[16,32], index: 0, kind: input, shape index: {}]
  %s1 = inlined_call_operand.vmem [shape: f32[32,128], index: 1, kind: input, shape index: {}]
  %s2 = inlined_call_operand.vmem [shape: f32[1,128], index: 2, kind: input, shape index: {}]
  %s3 = inlined_call_operand.vmem [shape: f32[128,32], index: 3, kind: input, shape index: {}]
  %s4 = inlined_call_operand.vmem [shape: f32[1,32], index: 4, kind: input, shape index: {}]
  %s5 = inlined_call_operand.hbm [shape: f32[16,32], index: 5, kind: output, shape index: {}]
  %s6 = sld [smem:[#allocation0]]
  $region30: #{tpu_custom_call.1} parent=0
    _
  %s8 = ssub.s32 1, %s6
  %s9 = scalar_select 0, %s8, %s6
  $region1: #{tpu_custom_call.1} parent=0
    #allocation2 [shape = 'u8[8192]{0}', space=vmem, size = 0x2000, scoped, tag = 'output window, operand 0, single buffered']
    #allocation3 [shape = 's32[1]{0}', space=sflag, size = 0x4, scoped, tag = 'scoped memory for tpu_custom_call.1']
    %10 = vsyncpa [#allocation3], 0
    // Predicated region
    $region2: #{tpu_custom_call.1} parent=1 // pred_check
      _
    $region3: #{tpu_custom_call.1} parent=1 // pred_check_branch
      %12 = sbr.rel (0) target = $region5
    $region4: #{tpu_custom_call.1} parent=1 // pred_region
      _
    $region5: #{tpu_custom_call.1} parent=1 // pred_fallthru
      _
    // Predicated region
    $region6: #{tpu_custom_call.1} parent=1 // pred_check
      _
    $region7: #{tpu_custom_call.1} parent=1 // pred_check_branch
      %14 = sbr.rel (0) target = $region9
    $region8: #{tpu_custom_call.1} parent=1 // pred_region
      _
    $region9: #{tpu_custom_call.1} parent=1 // pred_fallthru
      _
    // Predicated region
    $region10: #{tpu_custom_call.1} parent=1 // pred_check
      _
    $region11: #{tpu_custom_call.1} parent=1 // pred_check_branch
      %16 = sbr.rel (0) target = $region13
    $region12: #{tpu_custom_call.1} parent=1 // pred_region
      _
    $region13: #{tpu_custom_call.1} parent=1 // pred_fallthru
      _
    // Predicated region
    $region14: #{tpu_custom_call.1} parent=1 // pred_check
      _
    $region15: #{tpu_custom_call.1} parent=1 // pred_check_branch
      %18 = sbr.rel (0) target = $region17
    $region16: #{tpu_custom_call.1} parent=1 // pred_region
      _
    $region17: #{tpu_custom_call.1} parent=1 // pred_fallthru
      _
    // Predicated region
    $region18: #{tpu_custom_call.1} parent=1 // pred_check
      _
    $region19: #{tpu_custom_call.1} parent=1 // pred_check_branch
      %20 = sbr.rel (0) target = $region21
    $region20: #{tpu_custom_call.1} parent=1 // pred_region
      _
    $region21: #{tpu_custom_call.1} parent=1 // pred_fallthru
      _
    %v21 = vld [vmem:[%s0] sm:$0xff]
    %v22 = vld [vmem:[%s0 + $0x8] sm:$0xff]
    %v23 = vld [vmem:[%s1] sm:$0xff]
    %v24 = vld [vmem:[%s1 + $0x8] sm:$0xff]
    %v25 = vld [vmem:[%s1 + $0x10] sm:$0xff]
    %v26 = vld [vmem:[%s1 + $0x18] sm:$0xff]
    %v27 = vld [vmem:[%s2] sm:$0x1]
    %v29 = vperm.slane %v27, 0
    %vm31 = vcmask 261120
    %v33 = vsel %vm31, %v21, 0
    %v36 = vsel %vm31, %v22, 0
    %38 = vmatpush.msra.mxu0 0.0
    %39 = vmatpush.msra.mxu0 0.0
    %40 = vmatpush.msra.mxu0 0.0
    %41 = vmatpush.msra.mxu0 0.0
    %42 = vmatpush.msra.mxu0 0.0
    %43 = vmatpush.msra.mxu0 0.0
    %44 = vmatpush.msra.mxu0 0.0
    %45 = vmatpush.msra.mxu0 0.0
    %46 = vmatpush.msra.mxu0 0.0
    %47 = vmatpush.msra.mxu0 0.0
    %48 = vmatpush.msra.mxu0 0.0
    %49 = vmatpush.msra.mxu0 0.0
    %50 = vmatpush.msra.mxu0 %v26
    %51 = vmatpush.msra.mxu0 %v25
    %52 = vmatpush.msra.mxu0 %v24
    %53 = vmatpush.msra.mxu0 %v23
    %54 = vmatmul.f32.gmra.mxu0 %v33
    %v55 = vpop.f32.mrf.mxu0
    %v56 = vadd.f32 %v29, %v55
    %57 = vmatmul.f32.gmra.mxu0 %v36
    %v58 = vpop.f32.mrf.mxu0
    %v59 = vadd.f32 %v29, %v58
    %60 = vdwg.mxu0
    %v61 = vmax.f32 %v56, 0.0
    %v62 = vmax.f32 %v59, 0.0
    %v63 = vld [vmem:[%s3] sm:$0xff]
    %v64 = vld [vmem:[%s3 + $0x8] sm:$0xff]
    %v65 = vld [vmem:[%s3 + $0x10] sm:$0xff]
    %v66 = vld [vmem:[%s3 + $0x18] sm:$0xff]
    %v67 = vld [vmem:[%s3 + $0x20] sm:$0xff]
    %v68 = vld [vmem:[%s3 + $0x28] sm:$0xff]
    %v69 = vld [vmem:[%s3 + $0x30] sm:$0xff]
    %v70 = vld [vmem:[%s3 + $0x38] sm:$0xff]
    %v71 = vld [vmem:[%s3 + $0x40] sm:$0xff]
    %v72 = vld [vmem:[%s3 + $0x48] sm:$0xff]
    %v73 = vld [vmem:[%s3 + $0x50] sm:$0xff]
    %v74 = vld [vmem:[%s3 + $0x58] sm:$0xff]
    %v75 = vld [vmem:[%s3 + $0x60] sm:$0xff]
    %v76 = vld [vmem:[%s3 + $0x68] sm:$0xff]
    %v77 = vld [vmem:[%s3 + $0x70] sm:$0xff]
    %v78 = vld [vmem:[%s3 + $0x78] sm:$0xff]
    %v79 = vld [vmem:[%s4] sm:$0x1]
    %v81 = vperm.slane %v79, 0
    %83 = vmatpush.msra.mxu0 %v78
    %84 = vmatpush.msra.mxu0 %v77
    %85 = vmatpush.msra.mxu0 %v76
    %86 = vmatpush.msra.mxu0 %v75
    %87 = vmatpush.msra.mxu0 %v74
    %88 = vmatpush.msra.mxu0 %v73
    %89 = vmatpush.msra.mxu0 %v72
    %90 = vmatpush.msra.mxu0 %v71
    %91 = vmatpush.msra.mxu0 %v70
    %92 = vmatpush.msra.mxu0 %v69
    %93 = vmatpush.msra.mxu0 %v68
    %94 = vmatpush.msra.mxu0 %v67
    %95 = vmatpush.msra.mxu0 %v66
    %96 = vmatpush.msra.mxu0 %v65
    %97 = vmatpush.msra.mxu0 %v64
    %98 = vmatpush.msra.mxu0 %v63
    %99 = vmatmul.f32.gmra.mxu0 %v61
    %v100 = vpop.f32.mrf.mxu0
    %v101 = vadd.f32 %v81, %v100
    %102 = vmatmul.f32.gmra.mxu0 %v62
    %v103 = vpop.f32.mrf.mxu0
    %v104 = vadd.f32 %v81, %v103
    %105 = vdwg.mxu0
    %v106 = vmax.f32 %v101, 0.0
    %v107 = vmax.f32 %v104, 0.0
    %108 = vst.msk [vmem:[#allocation2] sm:$0xff] %vm31, %v106
    %109 = vst.msk [vmem:[#allocation2 + $0x8] sm:$0xff] %vm31, %v107
    // Predicated region
    $region22: #{tpu_custom_call.1} parent=1 // pred_check
      _
    $region23: #{tpu_custom_call.1} parent=1 // pred_check_branch
      %111 = sbr.rel (0) target = $region25
    $region24: #{tpu_custom_call.1} parent=1 // pred_region
      %113 = vsyncadd [#allocation3], 0
      %s114 = sshll.u32 [#allocation2], 4
      %s115 = int_to_ptr.vmem [resolvable:$true] %s114
      %s116 = sshll.u32 %s5, 4
      %s117 = int_to_ptr.hbm [resolvable:$true] %s116
      %122 = dma.vmem_to_hbm [thread:$0]  %s115, 256, %s117, [#allocation3], 128, 128, 8
    $region25: #{tpu_custom_call.1} parent=1 // pred_fallthru
      _
    // Predicated region
    $region26: #{tpu_custom_call.1} parent=1 // pred_check
      _
    $region27: #{tpu_custom_call.1} parent=1 // pred_check_branch
      %124 = sbr.rel (0) target = $region29
    $region28: #{tpu_custom_call.1} parent=1 // pred_region
      %126 = dma.done [#allocation3], 256
    $region29: #{tpu_custom_call.1} parent=1 // pred_fallthru
      _
    %127 = vsyncpa [#allocation3], 1

</llo_original>
